<compile_context>
chip_gen: v5e
topology: v5e:2x2
jax: 0.10.0
libtpu: 0.0.40
codegen_flags: <defaults>
</compile_context>

<pallas_src>
import functools

import jax
import jax.numpy as jnp
from jax.experimental import pallas as pl
from jax.experimental.pallas import tpu as pltpu


def _round_up(x, m):
    return ((x + m - 1) // m) * m


def _spmm_kernel(blk_idx_ref, counts_ref, adj_ref, emb_ref, out_ref, *, tk, resident):
    i = pl.program_id(0)
    k = pl.program_id(1)

    @pl.when(k == 0)
    def _():
        out_ref[...] = jnp.zeros_like(out_ref)

    # Skip padded / all-zero adjacency blocks: the index_map repeats the last valid
    # block index for them, so no new DMA is issued and the compute is gated off.
    @pl.when(k < counts_ref[i])
    def _():
        if resident:
            # Embedding matrix is fully VMEM-resident; slice the k-block locally.
            kb = blk_idx_ref[i * pl.num_programs(1) + k]
            off = pl.multiple_of(kb * tk, tk)
            emb = emb_ref[pl.ds(off, tk), :]
        else:
            emb = emb_ref[...]
        out_ref[...] += jnp.dot(adj_ref[...], emb,
                                preferred_element_type=jnp.float32)


def build_block_plan(adj, *, tm=256, tk=256):
    """Per-graph preprocessing (pad + block-sparsity scan + index table).

    Do this once per graph and reuse across GCN layers / epochs: it reads the
    N*N adjacency and does one host sync (max nonzero blocks per row tile),
    which is amortized away when reused.  max_blocks is bucketed to a power of
    two to bound recompiles across sparsity patterns.
    """
    adj = jnp.asarray(adj, jnp.float32)
    N, K = adj.shape
    Np, Kp = _round_up(N, tm), _round_up(K, tk)
    adj_p = jnp.pad(adj, ((0, Np - N), (0, Kp - K)))
    n_i, n_k = Np // tm, Kp // tk

    blk_nnz = jnp.any(adj_p.reshape(n_i, tm, n_k, tk) != 0.0, axis=(1, 3))   # (n_i, n_k)
    counts = jnp.sum(blk_nnz, axis=1).astype(jnp.int32)                      # (n_i,)
    order = jnp.argsort(jnp.where(blk_nnz, 0, 1).astype(jnp.int32),
                        axis=1, stable=True)
    pos = jnp.arange(n_k, dtype=jnp.int32)[None, :]
    last_valid = order[jnp.arange(n_i), jnp.maximum(counts - 1, 0)]
    blk_idx = jnp.where(pos < counts[:, None], order,
                        last_valid[:, None]).astype(jnp.int32)

    max_count = max(int(jnp.max(counts)), 1)                   # one host sync per graph
    max_blocks = min(int(pl.next_power_of_2(max_count)), n_k)  # bucket -> fewer recompiles
    blk_idx_flat = blk_idx[:, :max_blocks].reshape(-1)         # 1-D: tiny SMEM footprint
    nnz_blocks = int(jnp.sum(counts))

    return dict(adj_p=adj_p, blk_idx=blk_idx_flat, counts=counts,
                N=N, K=K, Np=Np, Kp=Kp, n_i=n_i, tm=tm, tk=tk,
                max_blocks=max_blocks, nnz_blocks=nnz_blocks)


def gcn_layer_from_plan(plan, embeds):
    """out = adj @ embeds using a precomputed block plan."""
    embeds = jnp.asarray(embeds, jnp.float32)
    K, D = embeds.shape
    assert K == plan["K"], "adjacency / embedding shape mismatch"

    tm, tk = plan["tm"], plan["tk"]
    N, Np, Kp = plan["N"], plan["Np"], plan["Kp"]
    n_i, max_blocks, nnz_blocks = plan["n_i"], plan["max_blocks"], plan["nnz_blocks"]

    Dp = _round_up(D, 128)
    emb_p = jnp.pad(embeds, ((0, Kp - K), (0, D and Dp - D)))

    # Keep the whole embedding resident in VMEM when it fits a v7x-safe budget
    # (count 2 pipeline buffers); otherwise stream one (tk, Dp) slab per k block.
    emb_full_bytes = Kp * Dp * 4
    resident = 2 * emb_full_bytes <= 24 * 1024 * 1024

    if resident:
        emb_spec = pl.BlockSpec((Kp, Dp), lambda i, k, blk, cnt: (0, 0))
        emb_vmem = 2 * emb_full_bytes
    else:
        emb_spec = pl.BlockSpec(
            (tk, Dp),
            lambda i, k, blk, cnt, mb=max_blocks: (blk[i * mb + k], 0))
        emb_vmem = 2 * tk * Dp * 4

    adj_spec = pl.BlockSpec(
        (tm, tk),
        lambda i, k, blk, cnt, mb=max_blocks: (i, blk[i * mb + k]))
    out_spec = pl.BlockSpec((tm, Dp), lambda i, k, blk, cnt: (i, 0))

    # Explicit VMEM budget: 2 adj buffers + 2 output buffers + emb (resident or
    # streamed), plus headroom.  Stays well under v7x's 64 MiB physical VMEM
    # because residency is capped above.
    need = 2 * tm * tk * 4 + 2 * tm * Dp * 4 + emb_vmem
    vmem_limit = int(min(96 << 20, max(32 << 20, need + (8 << 20))))

    kernel = functools.partial(_spmm_kernel, tk=tk, resident=resident)

    out_p = pl.pallas_call(
        kernel,
        out_shape=jax.ShapeDtypeStruct((Np, Dp), jnp.float32),
        grid_spec=pltpu.PrefetchScalarGridSpec(
            num_scalar_prefetch=2,
            grid=(n_i, max_blocks),
            in_specs=[adj_spec, emb_spec],
            out_specs=out_spec,
        ),
        compiler_params=pltpu.CompilerParams(
            dimension_semantics=("parallel", "arbitrary"),
            vmem_limit_bytes=vmem_limit,
        ),
        cost_estimate=pl.CostEstimate(
            flops=2 * nnz_blocks * tm * tk * Dp,
            transcendentals=0,
            bytes_accessed=(nnz_blocks * tm * tk * 4
                            + (Kp * Dp * 4 if resident else nnz_blocks * tk * Dp * 4)
                            + Np * Dp * 4),
        ),
    )(plan["blk_idx"], plan["counts"], plan["adj_p"], emb_p)

    return out_p[:N, :D]


def gcn_layer(adj, embeds, *, tm=256, tk=256):
    """Convenience wrapper: builds the per-graph plan and runs the kernel.

    For repeated use (multiple layers / epochs on the same graph), call
    build_block_plan once and reuse it with gcn_layer_from_plan.
    """
    plan = build_block_plan(adj, tm=tm, tk=tk)
    return gcn_layer_from_plan(plan, embeds)


if __name__ == "__main__":
    key = jax.random.PRNGKey(0)
    k_adj, k_emb = jax.random.split(key)

    # Small banded graph: 512 nodes, 128-dim features.
    N, D = 512, 128
    ii = jnp.arange(N)
    band = (jnp.abs(ii[:, None] - ii[None, :]) <= 24).astype(jnp.float32)
    rnd = (jax.random.uniform(k_adj, (N, N)) < 0.3).astype(jnp.float32)
    m = band * rnd
    adj = jnp.clip(m + m.T + jnp.eye(N, dtype=jnp.float32), 0.0, 1.0)
    deg = jnp.sum(adj, axis=1, keepdims=True)
    adj = adj / jnp.maximum(deg, 1.0)          # typical GCN row normalization

    embeds = jax.random.normal(k_emb, (N, D), dtype=jnp.float32)

    # Plan is built once per graph; kernel uses MXU-filling 256x256 tiles and an
    # even number of row tiles (n_i = 2) so both v7x TensorCores are used.
    plan = build_block_plan(adj, tm=256, tk=256)
    out = gcn_layer_from_plan(plan, embeds)
    out = jax.block_until_ready(out)

    ref = jnp.dot(adj, embeds, precision=jax.lax.Precision.HIGHEST)
    assert out.shape == (N, D)
    # f32 inputs, f32 MXU accumulation -> tight agreement with the f32 reference.
    assert jnp.allclose(out, ref, atol=1e-2, rtol=1e-2), float(
        jnp.max(jnp.abs(out - ref)))

    # TODO(synk): the flag=False branch (torch.spmm on COO indices/values) has no
    # clean dense-BlockSpec equivalent; the block-sparse skip above captures the
    # same win at tile granularity and reproduces the same numerical result.
    print("KERNEL_OK")
</pallas_src>

<mosaic_0001>
module attributes {stable_mosaic.version = 11 : i64} {
  func.func @_spmm_kernel(%arg0: i32, %arg1: i32, %arg2: memref<4xi32, #tpu.memory_space<smem>>, %arg3: memref<2xi32, #tpu.memory_space<smem>>, %arg4: memref<256x256xf32, #tpu.memory_space<vmem>>, %arg5: memref<512x128xf32, #tpu.memory_space<vmem>>, %arg6: memref<256x128xf32, #tpu.memory_space<vmem>>) attributes {dimension_semantics = [#tpu.dimension_semantics<parallel>, #tpu.dimension_semantics<arbitrary>], iteration_bounds = array<i64: 2, 2>, scalar_prefetch = 2 : i64, scratch_operands = 0 : i64, tpu.core_type = #tpu.core_type<tc>, window_params = [{transform_indices = @transform_0, window_bounds = array<i64: 256, 256>}, {pipeline_mode = #tpu.pipeline_mode<synchronous>, transform_indices = @transform_1, window_bounds = array<i64: 512, 128>}, {transform_indices = @transform_2, window_bounds = array<i64: 256, 128>}]} {
    %c0_i32 = arith.constant 0 : i32
    %0 = arith.cmpi eq, %arg1, %c0_i32 : i32
    %1 = arith.extui %0 : i1 to i32
    %c0_i32_0 = arith.constant 0 : i32
    %2 = arith.cmpi ne, %1, %c0_i32_0 : i32
    scf.if %2 {
      %cst = arith.constant 0.000000e+00 : f32
      %8 = vector.broadcast %cst : f32 to vector<256x128xf32>
      %c0 = arith.constant 0 : index
      %c0_2 = arith.constant 0 : index
      %9 = vector.load %arg6[%c0, %c0_2] : memref<256x128xf32, #tpu.memory_space<vmem>>, vector<256x128xf32>
      tpu.vector_store %arg6[%c0, %c0_2], %8 {strides = array<i32>} : memref<256x128xf32, #tpu.memory_space<vmem>>, vector<256x128xf32>,
    } else {
    }
    %3 = arith.index_cast %arg0 : i32 to index
    %4 = memref.load %arg3[%3] : memref<2xi32, #tpu.memory_space<smem>>
    %5 = arith.cmpi slt, %arg1, %4 : i32
    %6 = arith.extui %5 : i1 to i32
    %c0_i32_1 = arith.constant 0 : i32
    %7 = arith.cmpi ne, %6, %c0_i32_1 : i32
    scf.if %7 {
      %c2_i32 = arith.constant 2 : i32
      %8 = arith.muli %arg0, %c2_i32 : i32
      %9 = arith.addi %8, %arg1 : i32
      %10 = arith.index_cast %9 : i32 to index
      %11 = memref.load %arg2[%10] : memref<4xi32, #tpu.memory_space<smem>>
      %c256_i32 = arith.constant 256 : i32
      %12 = arith.muli %11, %c256_i32 : i32
      %13 = tpu.assume_multiple %12, 256 : i32
      %14 = arith.index_cast %13 : i32 to index
      %c0 = arith.constant 0 : index
      %15 = vector.load %arg5[%14, %c0] : memref<512x128xf32, #tpu.memory_space<vmem>>, vector<256x128xf32>
      %c0_2 = arith.constant 0 : index
      %c0_3 = arith.constant 0 : index
      %16 = vector.load %arg6[%c0_2, %c0_3] : memref<256x128xf32, #tpu.memory_space<vmem>>, vector<256x128xf32>
      %c0_4 = arith.constant 0 : index
      %c0_5 = arith.constant 0 : index
      %17 = vector.load %arg4[%c0_4, %c0_5] : memref<256x256xf32, #tpu.memory_space<vmem>>, vector<256x256xf32>
      %cst = arith.constant dense<0.000000e+00> : vector<256x128xf32>
      %18 = tpu.matmul %17, %15, %cst {dimension_numbers = #tpu.dot_dimension_numbers<[1], [0], [0], [1], [0, 0, 1, 1], [], []>} : vector<256x256xf32>, vector<256x128xf32>, vector<256x128xf32> -> vector<256x128xf32>
      %19 = arith.addf %16, %18 : vector<256x128xf32>
      %c0_6 = arith.constant 0 : index
      %c0_7 = arith.constant 0 : index
      %20 = vector.load %arg6[%c0_6, %c0_7] : memref<256x128xf32, #tpu.memory_space<vmem>>, vector<256x128xf32>
      tpu.vector_store %arg6[%c0_6, %c0_7], %19 {strides = array<i32>} : memref<256x128xf32, #tpu.memory_space<vmem>>, vector<256x128xf32>,
    } else {
    }
    return
  }
  func.func @transform_0(%arg0: i32, %arg1: i32, %arg2: memref<4xi32, #tpu.memory_space<smem>>, %arg3: memref<2xi32, #tpu.memory_space<smem>>) -> (i32, i32) {
    %c2_i32 = arith.constant 2 : i32
    %0 = arith.muli %arg0, %c2_i32 : i32
    %1 = arith.addi %0, %arg1 : i32
    %2 = arith.index_cast %1 : i32 to index
    %3 = memref.load %arg2[%2] : memref<4xi32, #tpu.memory_space<smem>>
    %c0_i32 = arith.constant 0 : i32
    return %arg0, %3 : i32, i32
  }
  func.func @transform_1(%arg0: i32, %arg1: i32, %arg2: memref<4xi32, #tpu.memory_space<smem>>, %arg3: memref<2xi32, #tpu.memory_space<smem>>) -> (i32, i32) {
    %c0_i32 = arith.constant 0 : i32
    %c0_i32_0 = arith.constant 0 : i32
    %c0_i32_1 = arith.constant 0 : i32
    return %c0_i32, %c0_i32_0 : i32, i32
  }
  func.func @transform_2(%arg0: i32, %arg1: i32, %arg2: memref<4xi32, #tpu.memory_space<smem>>, %arg3: memref<2xi32, #tpu.memory_space<smem>>) -> (i32, i32) {
    %c0_i32 = arith.constant 0 : i32
    %c0_i32_0 = arith.constant 0 : i32
    return %arg0, %c0_i32 : i32, i32
  }
}

</mosaic_0001>

<llo_original>
// kernel: tpu_custom_call.1
$region0: #{tpu_custom_call.1}
  #allocation0 [shape = 'u32[]', space=smem, size = 0x4, offset = 0x4, fixed_abs, tag = 'smem constant byte address 0x4 - core index']
  #allocation1 [shape = 'u32[72,128]{1,0:T(1,128)}', space=vmem, size = 0x9000, scoped, tag = 'internal scratch']
  #allocation2 [shape = 's32[1]{0}', space=sflag, size = 0x4, scoped, tag = 'scoped memory for tpu_custom_call.1']
  #allocation3 [shape = 'u8[512]{0}', space=smem, size = 0x200, scoped, tag = 'prefetched SMEM operand 0']
  #allocation4 [shape = 'u8[512]{0}', space=smem, size = 0x200, scoped, tag = 'prefetched SMEM operand 1']
  %s0 = inlined_call_operand.hbm [shape: s32[4], index: 0, kind: input, shape index: {}]
  %s1 = inlined_call_operand.hbm [shape: s32[2], index: 1, kind: input, shape index: {}]
  %s2 = inlined_call_operand.hbm [shape: f32[512,512], index: 2, kind: input, shape index: {}]
  %s3 = inlined_call_operand.hbm [shape: f32[512,128], index: 3, kind: input, shape index: {}]
  %s4 = inlined_call_operand.hbm [shape: f32[512,128], index: 4, kind: output, shape index: {}]
  %s5 = sld [smem:[#allocation0]]
  $region57: #{tpu_custom_call.1} parent=0
    _
  %s7 = ssub.s32 1, %s5
  %s8 = scalar_select 0, %s7, %s5
  %s10 = sshll.u32 %s0, 4
  %s11 = int_to_ptr.hbm [resolvable:$true] %s10
  %13 = dma.hbm_to_smem %s11, 16, [#allocation3], [#allocation2]
  %s15 = sshll.u32 %s1, 4
  %s16 = int_to_ptr.hbm [resolvable:$true] %s15
  %18 = dma.hbm_to_smem %s16, 16, [#allocation4], [#allocation2]
  %20 = dma.done [#allocation2], 32
  %21 = sfence
  $region1: #{tpu_custom_call.1} parent=0
    #allocation5 [shape = 'u8[524288]{0}', space=vmem, size = 0x80000, scoped, tag = 'input window, operand 2']
    #allocation6 [shape = 's32[2]{0}', space=sflag, size = 0x8, scoped, tag = 'scoped memory for tpu_custom_call.1']
    #allocation7 [shape = 's32[2]{0}', space=sflag, size = 0x8, scoped, tag = 'scoped memory for tpu_custom_call.1']
    #allocation8 [shape = 'u8[262144]{0}', space=vmem, size = 0x40000, scoped, tag = 'input window, operand 3, single buffered']
    #allocation9 [shape = 's32[1]{0}', space=sflag, size = 0x4, scoped, tag = 'scoped memory for tpu_custom_call.1']
    #allocation10 [shape = 'u8[262144]{0}', space=vmem, size = 0x40000, scoped, tag = 'output window, operand 0']
    %22 = vsyncpa [#allocation6], 0
    %s23 = scalar_lea.sflag [#allocation6], 1
    %24 = vsyncpa %s23, 0
    %25 = vsyncpa [#allocation9], 0
    %26 = vsyncpa [#allocation7], 0
    %s27 = scalar_lea.sflag [#allocation7], 1
    %28 = vsyncpa %s27, 0
    loop: start=0, step=1, limit=6
    $region2: #{tpu_custom_call.1} parent=1 // loop_pre_header
      _
    $region3: #{tpu_custom_call.1} parent=1 // loop_header
      %s30 = sphi 0, %s34
      %p31 = scmp.ge.s32.totalorder %s30, 6
      %s37 = sphi 0, %s49
      %s38 = sphi 0, %s45
      %s39 = sphi 0, %s37
      %s40 = sphi 0, %s38
      %s41 = sphi 0, %s39
      %s42 = sphi 0, %s40
      %s60 = sphi 0, %s62
      %s63 = sphi 0, %s60
      %s64 = sphi 0, %s63
      %s80 = sphi 0, %s64
      %s84 = sphi 0, %s84
      %s86 = sphi 0, %s84
      %s87 = sphi 0, %s86
      %s101 = sphi 0, %s87
      %s107 = sphi 0, %s109
      %s110 = sphi 0, %s107
      %s111 = sphi 0, %s110
      %s127 = sphi 0, %s111
    $region4: #{tpu_custom_call.1} parent=1 // loop_header_branch
      %33 = sbr.rel (%p31) target = $region8
    $region5: #{tpu_custom_call.1} parent=1 // loop_body
      %s35 = ssub.s32 %s30, 1
      %s36 = ssub.s32 %s30, 2
      %s43 = sadd.s32 1, %s38
      %p44 = scmp.ge.s32.totalorder %s43, 2
      %s45 = scalar_select %p44, 0, %s43
      %s46 = sadd.s32 1, %s37
      %s47 = scalar_select %p44, %s46, %s37
      %p48 = scmp.ge.s32.totalorder %s47, 2
      %s49 = scalar_select %p48, 0, %s47
      %s50 = smul.u32 %s37, 2
      %s51 = sadd.s32 %s50, %s38
      %s52 = sld [smem:[#allocation3 + %s51]]
      %s53 = smul.u32 %s49, 2
      %s54 = sadd.s32 %s53, %s45
      %s55 = sld [smem:[#allocation3 + %s54]]
      %s56 = ssub.s32 %s37, %s49
      %s57 = ssub.s32 %s52, %s55
      %s58 = sor.u32 %s56, %s57
      %p59 = scmp.eq.s32.totalorder %s58, 0
      %s61 = sadd.s32 %s60, 1
      %s62 = scalar_select %p59, %s60, %s61
      %p65 = pneg %p59
      %p66 = scmp.eq.s32.totalorder %s30, 3
      %p67 = por %p65, %p66
      %p68 = scmp.ne.s32.totalorder %s60, %s63
      %p69 = scmp.eq.s32.totalorder %s30, 0
      %p70 = por %p68, %p69
      %p71 = scmp.ne.s32.totalorder %s60, %s63
      %p72 = scmp.eq.s32.totalorder %s35, 3
      %p73 = por %p71, %p72
      %p74 = scmp.ne.s32.totalorder %s63, %s64
      %p75 = scmp.eq.s32.totalorder %s35, 0
      %p76 = por %p74, %p75
      %p77 = scmp.ne.s32.totalorder %s63, %s64
      %p78 = scmp.eq.s32.totalorder %s36, 3
      %p79 = por %p77, %p78
      %p81 = scmp.ne.s32.totalorder %s64, %s80
      %p82 = scmp.eq.s32.totalorder %s36, 0
      %p83 = por %p81, %p82
      %s85 = sadd.s32 %s84, 1
      %p88 = scmp.eq.s32.totalorder %s30, 3
      %p89 = scmp.ne.s32.totalorder %s84, %s86
      %p90 = scmp.eq.s32.totalorder %s30, 0
      %p91 = por %p89, %p90
      %p92 = scmp.ne.s32.totalorder %s84, %s86
      %p93 = scmp.eq.s32.totalorder %s35, 3
      %p94 = por %p92, %p93
      %p95 = scmp.ne.s32.totalorder %s86, %s87
      %p96 = scmp.eq.s32.totalorder %s35, 0
      %p97 = por %p95, %p96
      %p98 = scmp.ne.s32.totalorder %s86, %s87
      %p99 = scmp.eq.s32.totalorder %s36, 3
      %p100 = por %p98, %p99
      %p102 = scmp.ne.s32.totalorder %s87, %s101
      %p103 = scmp.eq.s32.totalorder %s36, 0
      %p104 = por %p102, %p103
      %s105 = ssub.s32 %s37, %s49
      %p106 = scmp.eq.s32.totalorder %s105, 0
      %s108 = sadd.s32 %s107, 1
      %s109 = scalar_select %p106, %s107, %s108
      %p112 = pneg %p106
      %p113 = scmp.eq.s32.totalorder %s30, 3
      %p114 = por %p112, %p113
      %p115 = scmp.ne.s32.totalorder %s107, %s110
      %p116 = scmp.eq.s32.totalorder %s30, 0
      %p117 = por %p115, %p116
      %p118 = scmp.ne.s32.totalorder %s107, %s110
      %p119 = scmp.eq.s32.totalorder %s35, 3
      %p120 = por %p118, %p119
      %p121 = scmp.ne.s32.totalorder %s110, %s111
      %p122 = scmp.eq.s32.totalorder %s35, 0
      %p123 = por %p121, %p122
      %p124 = scmp.ne.s32.totalorder %s110, %s111
      %p125 = scmp.eq.s32.totalorder %s36, 3
      %p126 = por %p124, %p125
      %p128 = scmp.ne.s32.totalorder %s111, %s127
      %p129 = scmp.eq.s32.totalorder %s36, 0
      %p130 = por %p128, %p129
      %p131 = scmp.le.s32.totalorder 1, %s30
      %p132 = scmp.lt.s32.totalorder %s30, 5
      %p133 = pnand %p131, %p132
      %p134 = pneg %p133
      // Predicated region
      $region9: #{tpu_custom_call.1} parent=5 // pred_check
        _
      $region10: #{tpu_custom_call.1} parent=5 // pred_check_branch
        %136 = sbr.rel (%p133) target = $region12
      $region11: #{tpu_custom_call.1} parent=5 // pred_region
        %s137 = ssub.s32 %s30, 1
        // Predicated region
        $region13: #{tpu_custom_call.1} parent=11 // pred_check
          %p138 = pneg %p97
        $region14: #{tpu_custom_call.1} parent=11 // pred_check_branch
          %140 = sbr.rel (%p138) target = $region16
        $region15: #{tpu_custom_call.1} parent=11 // pred_region
          %142 = vsyncadd [#allocation9], 0
          %s143 = sshll.u32 %s3, 4
          %s144 = int_to_ptr.hbm [resolvable:$true] %s143
          %s145 = sshll.u32 [#allocation8], 4
          %s146 = int_to_ptr.vmem [resolvable:$true] %s145
          %151 = dma.hbm_to_vmem [thread:$0]  %s144, 8192, %s146, [#allocation9], 128, 128, 8
        $region16: #{tpu_custom_call.1} parent=11 // pred_fallthru
          _
      $region12: #{tpu_custom_call.1} parent=5 // pred_fallthru
        _
      %p152 = scmp.lt.s32.totalorder %s30, 4
      // Predicated region
      $region17: #{tpu_custom_call.1} parent=5 // pred_check
        %p153 = pneg %p152
      $region18: #{tpu_custom_call.1} parent=5 // pred_check_branch
        %155 = sbr.rel (%p153) target = $region20
      $region19: #{tpu_custom_call.1} parent=5 // pred_region
        // Predicated region
        $region21: #{tpu_custom_call.1} parent=19 // pred_check
          %p156 = pneg %p70
        $region22: #{tpu_custom_call.1} parent=19 // pred_check_branch
          %158 = sbr.rel (%p156) target = $region24
        $region23: #{tpu_custom_call.1} parent=19 // pred_region
          %s159 = sand.u32 %s60, 1
          %s160 = scalar_lea.sflag [#allocation6], %s159
          %s161 = sand.u32 %s60, 1
          %s162 = smul.addr %s161, 512
          %s163 = scalar_lea.vmem [#allocation5], %s162
          %s164 = smul.u32 %s37, 2
          %s165 = sadd.s32 %s164, %s38
          %s166 = sld [smem:[#allocation3 + %s165]]
          %s167 = smul.u32 32, %s37
          %s168 = smul.u32 2, %s166
          %170 = vsyncadd %s160, 0
          %s171 = smul.addr %s167, 4
          %s172 = sadd.s32 %s168, %s171
          %s173 = smul.addr %s172, 8
          %s174 = scalar_lea.hbm %s2, %s173
          %s175 = sshll.u32 %s174, 4
          %s176 = int_to_ptr.hbm [resolvable:$true] %s175
          %s177 = sshll.u32 %s163, 4
          %s178 = int_to_ptr.vmem [resolvable:$true] %s177
          %183 = dma.hbm_to_vmem [thread:$0]  %s176, 8192, %s178, %s160, 512, 256, 16
        $region24: #{tpu_custom_call.1} parent=19 // pred_fallthru
          _
      $region20: #{tpu_custom_call.1} parent=5 // pred_fallthru
        _
      %p184 = scmp.le.s32.totalorder 1, %s30
      %p185 = scmp.lt.s32.totalorder %s30, 5
      %p186 = pnand %p184, %p185
      %p187 = pneg %p186
      // Predicated region
      $region25: #{tpu_custom_call.1} parent=5 // pred_check
        _
      $region26: #{tpu_custom_call.1} parent=5 // pred_check_branch
        %189 = sbr.rel (%p186) target = $region28
      $region27: #{tpu_custom_call.1} parent=5 // pred_region
        %s190 = ssub.s32 %s30, 1
        %s191 = sand.u32 %s63, 1
        %s192 = scalar_lea.sflag [#allocation6], %s191
        %s193 = sand.u32 %s63, 1
        %s194 = smul.addr %s193, 512
        %s195 = scalar_lea.vmem [#allocation5], %s194
        // Predicated region
        $region29: #{tpu_custom_call.1} parent=27 // pred_check
          %p196 = pneg %p76
        $region30: #{tpu_custom_call.1} parent=27 // pred_check_branch
          %198 = sbr.rel (%p196) target = $region32
        $region31: #{tpu_custom_call.1} parent=27 // pred_region
          %200 = dma.done %s192, 8192
        $region32: #{tpu_custom_call.1} parent=27 // pred_fallthru
          _
        // Predicated region
        $region33: #{tpu_custom_call.1} parent=27 // pred_check
          %p201 = pneg %p97
        $region34: #{tpu_custom_call.1} parent=27 // pred_check_branch
          %203 = sbr.rel (%p201) target = $region36
        $region35: #{tpu_custom_call.1} parent=27 // pred_region
          %205 = dma.done [#allocation9], 8192
        $region36: #{tpu_custom_call.1} parent=27 // pred_fallthru
          _
        %s206 = sand.u32 %s63, 1
        %s207 = scalar_lea.sflag [#allocation6], %s206
        %s208 = sand.u32 %s63, 1
        %s209 = smul.addr %s208, 512
        %s210 = scalar_lea.vmem [#allocation5], %s209
        %p211 = pneg %p76
        %p212 = pneg %p73
        %p213 = pneg %p97
        %p214 = pneg %p94
        %p215 = pneg %p123
        %p216 = pneg %p120
        %s217 = sand.u32 %s110, 1
        %s218 = scalar_lea.sflag [#allocation7], %s217
        %s219 = sand.u32 %s110, 1
        %s220 = smul.addr %s219, 256
        %s221 = scalar_lea.vmem [#allocation10], %s220
        %s222 = smul.u32 %s39, 2
        %s223 = sadd.s32 %s222, %s40
        %s224 = sld [smem:[#allocation3 + %s223]]
        %s225 = smul.u32 32, %s39
        %s226 = smul.u32 2, %s224
        %s227 = smul.u32 32, %s39
        %p228 = scmp.eq.s32.totalorder %s40, 0
        // Predicated region
        $region37: #{tpu_custom_call.1} parent=27 // pred_check
          %p229 = pneg %p228
        $region38: #{tpu_custom_call.1} parent=27 // pred_check_branch
          %231 = sbr.rel (%p229) target = $region40
        $region39: #{tpu_custom_call.1} parent=27 // pred_region
          %232 = vst [vmem:[%s221] sm:$0xff] 0.0
          %233 = vst [vmem:[%s221 + $0x8] sm:$0xff] 0.0
          %234 = vst [vmem:[%s221 + $0x10] sm:$0xff] 0.0
          %235 = vst [vmem:[%s221 + $0x18] sm:$0xff] 0.0
          %236 = vst [vmem:[%s221 + $0x20] sm:$0xff] 0.0
          %237 = vst [vmem:[%s221 + $0x28] sm:$0xff] 0.0
          %238 = vst [vmem:[%s221 + $0x30] sm:$0xff] 0.0
          %239 = vst [vmem:[%s221 + $0x38] sm:$0xff] 0.0
          %240 = vst [vmem:[%s221 + $0x40] sm:$0xff] 0.0
          %241 = vst [vmem:[%s221 + $0x48] sm:$0xff] 0.0
          %242 = vst [vmem:[%s221 + $0x50] sm:$0xff] 0.0
          %243 = vst [vmem:[%s221 + $0x58] sm:$0xff] 0.0
          %244 = vst [vmem:[%s221 + $0x60] sm:$0xff] 0.0
          %245 = vst [vmem:[%s221 + $0x68] sm:$0xff] 0.0
          %246 = vst [vmem:[%s221 + $0x70] sm:$0xff] 0.0
          %247 = vst [vmem:[%s221 + $0x78] sm:$0xff] 0.0
          %248 = vst [vmem:[%s221 + $0x80] sm:$0xff] 0.0
          %249 = vst [vmem:[%s221 + $0x88] sm:$0xff] 0.0
          %250 = vst [vmem:[%s221 + $0x90] sm:$0xff] 0.0
          %251 = vst [vmem:[%s221 + $0x98] sm:$0xff] 0.0
          %252 = vst [vmem:[%s221 + $0xa0] sm:$0xff] 0.0
          %253 = vst [vmem:[%s221 + $0xa8] sm:$0xff] 0.0
          %254 = vst [vmem:[%s221 + $0xb0] sm:$0xff] 0.0
          %255 = vst [vmem:[%s221 + $0xb8] sm:$0xff] 0.0
          %256 = vst [vmem:[%s221 + $0xc0] sm:$0xff] 0.0
          %257 = vst [vmem:[%s221 + $0xc8] sm:$0xff] 0.0
          %258 = vst [vmem:[%s221 + $0xd0] sm:$0xff] 0.0
          %259 = vst [vmem:[%s221 + $0xd8] sm:$0xff] 0.0
          %260 = vst [vmem:[%s221 + $0xe0] sm:$0xff] 0.0
          %261 = vst [vmem:[%s221 + $0xe8] sm:$0xff] 0.0
          %262 = vst [vmem:[%s221 + $0xf0] sm:$0xff] 0.0
          %263 = vst [vmem:[%s221 + $0xf8] sm:$0xff] 0.0
        $region40: #{tpu_custom_call.1} parent=27 // pred_fallthru
          _
        %s264 = sld [smem:[#allocation4 + %s39]]
        %p265 = scmp.lt.s32.totalorder %s40, %s264
        // Predicated region
        $region41: #{tpu_custom_call.1} parent=27 // pred_check
          %p266 = pneg %p265
        $region42: #{tpu_custom_call.1} parent=27 // pred_check_branch
          %268 = sbr.rel (%p266) target = $region44
        $region43: #{tpu_custom_call.1} parent=27 // pred_region
          %s269 = smul.u32 %s39, 2
          %s270 = sadd.s32 %s269, %s40
          %s271 = sld [smem:[#allocation3 + %s270]]
          %s272 = smul.u32 %s271, 256
          %s273 = scalar_lea.vmem [#allocation8], %s272
          %v274 = vld [vmem:[%s273] sm:$0xff]
          %v275 = vld [vmem:[%s273 + $0x8] sm:$0xff]
          %v276 = vld [vmem:[%s273 + $0x10] sm:$0xff]
          %v277 = vld [vmem:[%s273 + $0x18] sm:$0xff]
          %v278 = vld [vmem:[%s273 + $0x20] sm:$0xff]
          %v279 = vld [vmem:[%s273 + $0x28] sm:$0xff]
          %v280 = vld [vmem:[%s273 + $0x30] sm:$0xff]
          %v281 = vld [vmem:[%s273 + $0x38] sm:$0xff]
          %v282 = vld [vmem:[%s273 + $0x40] sm:$0xff]
          %v283 = vld [vmem:[%s273 + $0x48] sm:$0xff]
          %v284 = vld [vmem:[%s273 + $0x50] sm:$0xff]
          %v285 = vld [vmem:[%s273 + $0x58] sm:$0xff]
          %v286 = vld [vmem:[%s273 + $0x60] sm:$0xff]
          %v287 = vld [vmem:[%s273 + $0x68] sm:$0xff]
          %v288 = vld [vmem:[%s273 + $0x70] sm:$0xff]
          %v289 = vld [vmem:[%s273 + $0x78] sm:$0xff]
          %v290 = vld [vmem:[%s273 + $0x80] sm:$0xff]
          %v291 = vld [vmem:[%s273 + $0x88] sm:$0xff]
          %v292 = vld [vmem:[%s273 + $0x90] sm:$0xff]
          %v293 = vld [vmem:[%s273 + $0x98] sm:$0xff]
          %v294 = vld [vmem:[%s273 + $0xa0] sm:$0xff]
          %v295 = vld [vmem:[%s273 + $0xa8] sm:$0xff]
          %v296 = vld [vmem:[%s273 + $0xb0] sm:$0xff]
          %v297 = vld [vmem:[%s273 + $0xb8] sm:$0xff]
          %v298 = vld [vmem:[%s273 + $0xc0] sm:$0xff]
          %v299 = vld [vmem:[%s273 + $0xc8] sm:$0xff]
          %v300 = vld [vmem:[%s273 + $0xd0] sm:$0xff]
          %v301 = vld [vmem:[%s273 + $0xd8] sm:$0xff]
          %v302 = vld [vmem:[%s273 + $0xe0] sm:$0xff]
          %v303 = vld [vmem:[%s273 + $0xe8] sm:$0xff]
          %v304 = vld [vmem:[%s273 + $0xf0] sm:$0xff]
          %v305 = vld [vmem:[%s273 + $0xf8] sm:$0xff]
          %v306 = vld [vmem:[%s221] sm:$0xff]
          %v307 = vld [vmem:[%s221 + $0x8] sm:$0xff]
          %v308 = vld [vmem:[%s221 + $0x10] sm:$0xff]
          %v309 = vld [vmem:[%s221 + $0x18] sm:$0xff]
          %v310 = vld [vmem:[%s221 + $0x20] sm:$0xff]
          %v311 = vld [vmem:[%s221 + $0x28] sm:$0xff]
          %v312 = vld [vmem:[%s221 + $0x30] sm:$0xff]
          %v313 = vld [vmem:[%s221 + $0x38] sm:$0xff]
          %v314 = vld [vmem:[%s221 + $0x40] sm:$0xff]
          %v315 = vld [vmem:[%s221 + $0x48] sm:$0xff]
          %v316 = vld [vmem:[%s221 + $0x50] sm:$0xff]
          %v317 = vld [vmem:[%s221 + $0x58] sm:$0xff]
          %v318 = vld [vmem:[%s221 + $0x60] sm:$0xff]
          %v319 = vld [vmem:[%s221 + $0x68] sm:$0xff]
          %v320 = vld [vmem:[%s221 + $0x70] sm:$0xff]
          %v321 = vld [vmem:[%s221 + $0x78] sm:$0xff]
          %v322 = vld [vmem:[%s221 + $0x80] sm:$0xff]
          %v323 = vld [vmem:[%s221 + $0x88] sm:$0xff]
          %v324 = vld [vmem:[%s221 + $0x90] sm:$0xff]
          %v325 = vld [vmem:[%s221 + $0x98] sm:$0xff]
          %v326 = vld [vmem:[%s221 + $0xa0] sm:$0xff]
          %v327 = vld [vmem:[%s221 + $0xa8] sm:$0xff]
          %v328 = vld [vmem:[%s221 + $0xb0] sm:$0xff]
          %v329 = vld [vmem:[%s221 + $0xb8] sm:$0xff]
          %v330 = vld [vmem:[%s221 + $0xc0] sm:$0xff]
          %v331 = vld [vmem:[%s221 + $0xc8] sm:$0xff]
          %v332 = vld [vmem:[%s221 + $0xd0] sm:$0xff]
          %v333 = vld [vmem:[%s221 + $0xd8] sm:$0xff]
          %v334 = vld [vmem:[%s221 + $0xe0] sm:$0xff]
          %v335 = vld [vmem:[%s221 + $0xe8] sm:$0xff]
          %v336 = vld [vmem:[%s221 + $0xf0] sm:$0xff]
          %v337 = vld [vmem:[%s221 + $0xf8] sm:$0xff]
          %v338 = vld [vmem:[%s195] sm:$0xff]
          %v339 = vld [vmem:[%s195 + $0x8] sm:$0xff]
          %v340 = vld [vmem:[%s195 + $0x10] sm:$0xff]
          %v341 = vld [vmem:[%s195 + $0x18] sm:$0xff]
          %v342 = vld [vmem:[%s195 + $0x20] sm:$0xff]
          %v343 = vld [vmem:[%s195 + $0x28] sm:$0xff]
          %v344 = vld [vmem:[%s195 + $0x30] sm:$0xff]
          %v345 = vld [vmem:[%s195 + $0x38] sm:$0xff]
          %v346 = vld [vmem:[%s195 + $0x40] sm:$0xff]
          %v347 = vld [vmem:[%s195 + $0x48] sm:$0xff]
          %v348 = vld [vmem:[%s195 + $0x50] sm:$0xff]
          %v349 = vld [vmem:[%s195 + $0x58] sm:$0xff]
          %v350 = vld [vmem:[%s195 + $0x60] sm:$0xff]
          %v351 = vld [vmem:[%s195 + $0x68] sm:$0xff]
          %v352 = vld [vmem:[%s195 + $0x70] sm:$0xff]
          %v353 = vld [vmem:[%s195 + $0x78] sm:$0xff]
          %v354 = vld [vmem:[%s195 + $0x80] sm:$0xff]
          %v355 = vld [vmem:[%s195 + $0x88] sm:$0xff]
          %v356 = vld [vmem:[%s195 + $0x90] sm:$0xff]
          %v357 = vld [vmem:[%s195 + $0x98] sm:$0xff]
          %v358 = vld [vmem:[%s195 + $0xa0] sm:$0xff]
          %v359 = vld [vmem:[%s195 + $0xa8] sm:$0xff]
          %v360 = vld [vmem:[%s195 + $0xb0] sm:$0xff]
          %v361 = vld [vmem:[%s195 + $0xb8] sm:$0xff]
          %v362 = vld [vmem:[%s195 + $0xc0] sm:$0xff]
          %v363 = vld [vmem:[%s195 + $0xc8] sm:$0xff]
          %v364 = vld [vmem:[%s195 + $0xd0] sm:$0xff]
          %v365 = vld [vmem:[%s195 + $0xd8] sm:$0xff]
          %v366 = vld [vmem:[%s195 + $0xe0] sm:$0xff]
          %v367 = vld [vmem:[%s195 + $0xe8] sm:$0xff]
          %v368 = vld [vmem:[%s195 + $0xf0] sm:$0xff]
          %v369 = vld [vmem:[%s195 + $0xf8] sm:$0xff]
          %v370 = vld [vmem:[%s195 + $0x100] sm:$0xff]
          %v371 = vld [vmem:[%s195 + $0x108] sm:$0xff]
          %v372 = vld [vmem:[%s195 + $0x110] sm:$0xff]
          %v373 = vld [vmem:[%s195 + $0x118] sm:$0xff]
          %v374 = vld [vmem:[%s195 + $0x120] sm:$0xff]
          %v375 = vld [vmem:[%s195 + $0x128] sm:$0xff]
          %v376 = vld [vmem:[%s195 + $0x130] sm:$0xff]
          %v377 = vld [vmem:[%s195 + $0x138] sm:$0xff]
          %v378 = vld [vmem:[%s195 + $0x140] sm:$0xff]
          %v379 = vld [vmem:[%s195 + $0x148] sm:$0xff]
          %v380 = vld [vmem:[%s195 + $0x150] sm:$0xff]
          %v381 = vld [vmem:[%s195 + $0x158] sm:$0xff]
          %v382 = vld [vmem:[%s195 + $0x160] sm:$0xff]
          %v383 = vld [vmem:[%s195 + $0x168] sm:$0xff]
          %v384 = vld [vmem:[%s195 + $0x170] sm:$0xff]
          %v385 = vld [vmem:[%s195 + $0x178] sm:$0xff]
          %v386 = vld [vmem:[%s195 + $0x180] sm:$0xff]
          %v387 = vld [vmem:[%s195 + $0x188] sm:$0xff]
          %v388 = vld [vmem:[%s195 + $0x190] sm:$0xff]
          %v389 = vld [vmem:[%s195 + $0x198] sm:$0xff]
          %v390 = vld [vmem:[%s195 + $0x1a0] sm:$0xff]
          %v391 = vld [vmem:[%s195 + $0x1a8] sm:$0xff]
          %v392 = vld [vmem:[%s195 + $0x1b0] sm:$0xff]
          %v393 = vld [vmem:[%s195 + $0x1b8] sm:$0xff]
          %v394 = vld [vmem:[%s195 + $0x1c0] sm:$0xff]
          %v395 = vld [vmem:[%s195 + $0x1c8] sm:$0xff]
          %v396 = vld [vmem:[%s195 + $0x1d0] sm:$0xff]
          %v397 = vld [vmem:[%s195 + $0x1d8] sm:$0xff]
          %v398 = vld [vmem:[%s195 + $0x1e0] sm:$0xff]
          %v399 = vld [vmem:[%s195 + $0x1e8] sm:$0xff]
          %v400 = vld [vmem:[%s195 + $0x1f0] sm:$0xff]
          %v401 = vld [vmem:[%s195 + $0x1f8] sm:$0xff]
          %402 = vmatpush.msra.mxu0 %v289
          %403 = vmatpush.msra.mxu0 %v288
          %404 = vmatpush.msra.mxu0 %v287
          %405 = vmatpush.msra.mxu0 %v286
          %406 = vmatpush.msra.mxu0 %v285
          %407 = vmatpush.msra.mxu0 %v284
          %408 = vmatpush.msra.mxu0 %v283
          %409 = vmatpush.msra.mxu0 %v282
          %410 = vmatpush.msra.mxu0 %v281
          %411 = vmatpush.msra.mxu0 %v280
          %412 = vmatpush.msra.mxu0 %v279
          %413 = vmatpush.msra.mxu0 %v278
          %414 = vmatpush.msra.mxu0 %v277
          %415 = vmatpush.msra.mxu0 %v276
          %416 = vmatpush.msra.mxu0 %v275
          %417 = vmatpush.msra.mxu0 %v274
          %418 = vmatmul.f32.gmra.mxu0 %v338
          %v419 = vpop.f32.mrf.mxu0
          %v420 = vadd.f32 0.0, %v419
          %421 = vmatmul.f32.gmra.mxu0 %v340
          %v422 = vpop.f32.mrf.mxu0
          %v423 = vadd.f32 0.0, %v422
          %424 = vmatmul.f32.gmra.mxu0 %v342
          %v425 = vpop.f32.mrf.mxu0
          %v426 = vadd.f32 0.0, %v425
          %427 = vmatmul.f32.gmra.mxu0 %v344
          %v428 = vpop.f32.mrf.mxu0
          %v429 = vadd.f32 0.0, %v428
          %430 = vmatmul.f32.gmra.mxu0 %v346
          %v431 = vpop.f32.mrf.mxu0
          %v432 = vadd.f32 0.0, %v431
          %433 = vmatmul.f32.gmra.mxu0 %v348
          %v434 = vpop.f32.mrf.mxu0
          %v435 = vadd.f32 0.0, %v434
          %436 = vmatmul.f32.gmra.mxu0 %v350
          %v437 = vpop.f32.mrf.mxu0
          %v438 = vadd.f32 0.0, %v437
          %439 = vmatmul.f32.gmra.mxu0 %v352
          %v440 = vpop.f32.mrf.mxu0
          %v441 = vadd.f32 0.0, %v440
          %442 = vmatmul.f32.gmra.mxu0 %v354
          %v443 = vpop.f32.mrf.mxu0
          %v444 = vadd.f32 0.0, %v443
          %445 = vmatmul.f32.gmra.mxu0 %v356
          %v446 = vpop.f32.mrf.mxu0
          %v447 = vadd.f32 0.0, %v446
          %448 = vmatmul.f32.gmra.mxu0 %v358
          %v449 = vpop.f32.mrf.mxu0
          %v450 = vadd.f32 0.0, %v449
          %451 = vmatmul.f32.gmra.mxu0 %v360
          %v452 = vpop.f32.mrf.mxu0
          %v453 = vadd.f32 0.0, %v452
          %454 = vmatmul.f32.gmra.mxu0 %v362
          %v455 = vpop.f32.mrf.mxu0
          %v456 = vadd.f32 0.0, %v455
          %457 = vmatmul.f32.gmra.mxu0 %v364
          %v458 = vpop.f32.mrf.mxu0
          %v459 = vadd.f32 0.0, %v458
          %460 = vmatmul.f32.gmra.mxu0 %v366
          %v461 = vpop.f32.mrf.mxu0
          %v462 = vadd.f32 0.0, %v461
          %463 = vmatmul.f32.gmra.mxu0 %v368
          %v464 = vpop.f32.mrf.mxu0
          %v465 = vadd.f32 0.0, %v464
          %466 = vmatmul.f32.gmra.mxu0 %v370
          %v467 = vpop.f32.mrf.mxu0
          %v468 = vadd.f32 0.0, %v467
          %469 = vmatmul.f32.gmra.mxu0 %v372
          %v470 = vpop.f32.mrf.mxu0
          %v471 = vadd.f32 0.0, %v470
          %472 = vmatmul.f32.gmra.mxu0 %v374
          %v473 = vpop.f32.mrf.mxu0
          %v474 = vadd.f32 0.0, %v473
          %475 = vmatmul.f32.gmra.mxu0 %v376
          %v476 = vpop.f32.mrf.mxu0
          %v477 = vadd.f32 0.0, %v476
          %478 = vmatmul.f32.gmra.mxu0 %v378
          %v479 = vpop.f32.mrf.mxu0
          %v480 = vadd.f32 0.0, %v479
          %481 = vmatmul.f32.gmra.mxu0 %v380
          %v482 = vpop.f32.mrf.mxu0
          %v483 = vadd.f32 0.0, %v482
          %484 = vmatmul.f32.gmra.mxu0 %v382
          %v485 = vpop.f32.mrf.mxu0
          %v486 = vadd.f32 0.0, %v485
          %487 = vmatmul.f32.gmra.mxu0 %v384
          %v488 = vpop.f32.mrf.mxu0
          %v489 = vadd.f32 0.0, %v488
          %490 = vmatmul.f32.gmra.mxu0 %v386
          %v491 = vpop.f32.mrf.mxu0
          %v492 = vadd.f32 0.0, %v491
          %493 = vmatmul.f32.gmra.mxu0 %v388
          %v494 = vpop.f32.mrf.mxu0
          %v495 = vadd.f32 0.0, %v494
          %496 = vmatmul.f32.gmra.mxu0 %v390
          %v497 = vpop.f32.mrf.mxu0
          %v498 = vadd.f32 0.0, %v497
          %499 = vmatmul.f32.gmra.mxu0 %v392
          %v500 = vpop.f32.mrf.mxu0
          %v501 = vadd.f32 0.0, %v500
          %502 = vmatmul.f32.gmra.mxu0 %v394
          %v503 = vpop.f32.mrf.mxu0
          %v504 = vadd.f32 0.0, %v503
          %505 = vmatmul.f32.gmra.mxu0 %v396
          %v506 = vpop.f32.mrf.mxu0
          %v507 = vadd.f32 0.0, %v506
          %508 = vmatmul.f32.gmra.mxu0 %v398
          %v509 = vpop.f32.mrf.mxu0
          %v510 = vadd.f32 0.0, %v509
          %511 = vmatmul.f32.gmra.mxu0 %v400
          %v512 = vpop.f32.mrf.mxu0
          %v513 = vadd.f32 0.0, %v512
          %514 = vdwg.mxu0
          %515 = vmatpush.msra.mxu0 %v305
          %516 = vmatpush.msra.mxu0 %v304
          %517 = vmatpush.msra.mxu0 %v303
          %518 = vmatpush.msra.mxu0 %v302
          %519 = vmatpush.msra.mxu0 %v301
          %520 = vmatpush.msra.mxu0 %v300
          %521 = vmatpush.msra.mxu0 %v299
          %522 = vmatpush.msra.mxu0 %v298
          %523 = vmatpush.msra.mxu0 %v297
          %524 = vmatpush.msra.mxu0 %v296
          %525 = vmatpush.msra.mxu0 %v295
          %526 = vmatpush.msra.mxu0 %v294
          %527 = vmatpush.msra.mxu0 %v293
          %528 = vmatpush.msra.mxu0 %v292
          %529 = vmatpush.msra.mxu0 %v291
          %530 = vmatpush.msra.mxu0 %v290
          %531 = vmatmul.f32.gmra.mxu0 %v339
          %v532 = vpop.f32.mrf.mxu0
          %v533 = vadd.f32 %v420, %v532
          %534 = vmatmul.f32.gmra.mxu0 %v341
          %v535 = vpop.f32.mrf.mxu0
          %v536 = vadd.f32 %v423, %v535
          %537 = vmatmul.f32.gmra.mxu0 %v343
          %v538 = vpop.f32.mrf.mxu0
          %v539 = vadd.f32 %v426, %v538
          %540 = vmatmul.f32.gmra.mxu0 %v345
          %v541 = vpop.f32.mrf.mxu0
          %v542 = vadd.f32 %v429, %v541
          %543 = vmatmul.f32.gmra.mxu0 %v347
          %v544 = vpop.f32.mrf.mxu0
          %v545 = vadd.f32 %v432, %v544
          %546 = vmatmul.f32.gmra.mxu0 %v349
          %v547 = vpop.f32.mrf.mxu0
          %v548 = vadd.f32 %v435, %v547
          %549 = vmatmul.f32.gmra.mxu0 %v351
          %v550 = vpop.f32.mrf.mxu0
          %v551 = vadd.f32 %v438, %v550
          %552 = vmatmul.f32.gmra.mxu0 %v353
          %v553 = vpop.f32.mrf.mxu0
          %v554 = vadd.f32 %v441, %v553
          %555 = vmatmul.f32.gmra.mxu0 %v355
          %v556 = vpop.f32.mrf.mxu0
          %v557 = vadd.f32 %v444, %v556
          %558 = vmatmul.f32.gmra.mxu0 %v357
          %v559 = vpop.f32.mrf.mxu0
          %v560 = vadd.f32 %v447, %v559
          %561 = vmatmul.f32.gmra.mxu0 %v359
          %v562 = vpop.f32.mrf.mxu0
          %v563 = vadd.f32 %v450, %v562
          %564 = vmatmul.f32.gmra.mxu0 %v361
          %v565 = vpop.f32.mrf.mxu0
          %v566 = vadd.f32 %v453, %v565
          %567 = vmatmul.f32.gmra.mxu0 %v363
          %v568 = vpop.f32.mrf.mxu0
          %v569 = vadd.f32 %v456, %v568
          %570 = vmatmul.f32.gmra.mxu0 %v365
          %v571 = vpop.f32.mrf.mxu0
          %v572 = vadd.f32 %v459, %v571
          %573 = vmatmul.f32.gmra.mxu0 %v367
          %v574 = vpop.f32.mrf.mxu0
          %v575 = vadd.f32 %v462, %v574
          %576 = vmatmul.f32.gmra.mxu0 %v369
          %v577 = vpop.f32.mrf.mxu0
          %v578 = vadd.f32 %v465, %v577
          %579 = vmatmul.f32.gmra.mxu0 %v371
          %v580 = vpop.f32.mrf.mxu0
          %v581 = vadd.f32 %v468, %v580
          %582 = vmatmul.f32.gmra.mxu0 %v373
          %v583 = vpop.f32.mrf.mxu0
          %v584 = vadd.f32 %v471, %v583
          %585 = vmatmul.f32.gmra.mxu0 %v375
          %v586 = vpop.f32.mrf.mxu0
          %v587 = vadd.f32 %v474, %v586
          %588 = vmatmul.f32.gmra.mxu0 %v377
          %v589 = vpop.f32.mrf.mxu0
          %v590 = vadd.f32 %v477, %v589
          %591 = vmatmul.f32.gmra.mxu0 %v379
          %v592 = vpop.f32.mrf.mxu0
          %v593 = vadd.f32 %v480, %v592
          %594 = vmatmul.f32.gmra.mxu0 %v381
          %v595 = vpop.f32.mrf.mxu0
          %v596 = vadd.f32 %v483, %v595
          %597 = vmatmul.f32.gmra.mxu0 %v383
          %v598 = vpop.f32.mrf.mxu0
          %v599 = vadd.f32 %v486, %v598
          %600 = vmatmul.f32.gmra.mxu0 %v385
          %v601 = vpop.f32.mrf.mxu0
          %v602 = vadd.f32 %v489, %v601
          %603 = vmatmul.f32.gmra.mxu0 %v387
          %v604 = vpop.f32.mrf.mxu0
          %v605 = vadd.f32 %v492, %v604
          %606 = vmatmul.f32.gmra.mxu0 %v389
          %v607 = vpop.f32.mrf.mxu0
          %v608 = vadd.f32 %v495, %v607
          %609 = vmatmul.f32.gmra.mxu0 %v391
          %v610 = vpop.f32.mrf.mxu0
          %v611 = vadd.f32 %v498, %v610
          %612 = vmatmul.f32.gmra.mxu0 %v393
          %v613 = vpop.f32.mrf.mxu0
          %v614 = vadd.f32 %v501, %v613
          %615 = vmatmul.f32.gmra.mxu0 %v395
          %v616 = vpop.f32.mrf.mxu0
          %v617 = vadd.f32 %v504, %v616
          %618 = vmatmul.f32.gmra.mxu0 %v397
          %v619 = vpop.f32.mrf.mxu0
          %v620 = vadd.f32 %v507, %v619
          %621 = vmatmul.f32.gmra.mxu0 %v399
          %v622 = vpop.f32.mrf.mxu0
          %v623 = vadd.f32 %v510, %v622
          %624 = vmatmul.f32.gmra.mxu0 %v401
          %v625 = vpop.f32.mrf.mxu0
          %v626 = vadd.f32 %v513, %v625
          %627 = vdwg.mxu0
          %v628 = vadd.f32 %v306, %v533
          %v629 = vadd.f32 %v307, %v536
          %v630 = vadd.f32 %v308, %v539
          %v631 = vadd.f32 %v309, %v542
          %v632 = vadd.f32 %v310, %v545
          %v633 = vadd.f32 %v311, %v548
          %v634 = vadd.f32 %v312, %v551
          %v635 = vadd.f32 %v313, %v554
          %v636 = vadd.f32 %v314, %v557
          %v637 = vadd.f32 %v315, %v560
          %v638 = vadd.f32 %v316, %v563
          %v639 = vadd.f32 %v317, %v566
          %v640 = vadd.f32 %v318, %v569
          %v641 = vadd.f32 %v319, %v572
          %v642 = vadd.f32 %v320, %v575
          %v643 = vadd.f32 %v321, %v578
          %v644 = vadd.f32 %v322, %v581
          %v645 = vadd.f32 %v323, %v584
          %v646 = vadd.f32 %v324, %v587
          %v647 = vadd.f32 %v325, %v590
          %v648 = vadd.f32 %v326, %v593
          %v649 = vadd.f32 %v327, %v596
          %v650 = vadd.f32 %v328, %v599
          %v651 = vadd.f32 %v329, %v602
          %v652 = vadd.f32 %v330, %v605
          %v653 = vadd.f32 %v331, %v608
          %v654 = vadd.f32 %v332, %v611
          %v655 = vadd.f32 %v333, %v614
          %v656 = vadd.f32 %v334, %v617
          %v657 = vadd.f32 %v335, %v620
          %v658 = vadd.f32 %v336, %v623
          %v659 = vadd.f32 %v337, %v626
          %660 = vst [vmem:[%s221] sm:$0xff] %v628
          %661 = vst [vmem:[%s221 + $0x8] sm:$0xff] %v629
          %662 = vst [vmem:[%s221 + $0x10] sm:$0xff] %v630
          %663 = vst [vmem:[%s221 + $0x18] sm:$0xff] %v631
          %664 = vst [vmem:[%s221 + $0x20] sm:$0xff] %v632
          %665 = vst [vmem:[%s221 + $0x28] sm:$0xff] %v633
          %666 = vst [vmem:[%s221 + $0x30] sm:$0xff] %v634
          %667 = vst [vmem:[%s221 + $0x38] sm:$0xff] %v635
          %668 = vst [vmem:[%s221 + $0x40] sm:$0xff] %v636
          %669 = vst [vmem:[%s221 + $0x48] sm:$0xff] %v637
          %670 = vst [vmem:[%s221 + $0x50] sm:$0xff] %v638
          %671 = vst [vmem:[%s221 + $0x58] sm:$0xff] %v639
          %672 = vst [vmem:[%s221 + $0x60] sm:$0xff] %v640
          %673 = vst [vmem:[%s221 + $0x68] sm:$0xff] %v641
          %674 = vst [vmem:[%s221 + $0x70] sm:$0xff] %v642
          %675 = vst [vmem:[%s221 + $0x78] sm:$0xff] %v643
          %676 = vst [vmem:[%s221 + $0x80] sm:$0xff] %v644
          %677 = vst [vmem:[%s221 + $0x88] sm:$0xff] %v645
          %678 = vst [vmem:[%s221 + $0x90] sm:$0xff] %v646
          %679 = vst [vmem:[%s221 + $0x98] sm:$0xff] %v647
          %680 = vst [vmem:[%s221 + $0xa0] sm:$0xff] %v648
          %681 = vst [vmem:[%s221 + $0xa8] sm:$0xff] %v649
          %682 = vst [vmem:[%s221 + $0xb0] sm:$0xff] %v650
          %683 = vst [vmem:[%s221 + $0xb8] sm:$0xff] %v651
          %684 = vst [vmem:[%s221 + $0xc0] sm:$0xff] %v652
          %685 = vst [vmem:[%s221 + $0xc8] sm:$0xff] %v653
          %686 = vst [vmem:[%s221 + $0xd0] sm:$0xff] %v654
          %687 = vst [vmem:[%s221 + $0xd8] sm:$0xff] %v655
          %688 = vst [vmem:[%s221 + $0xe0] sm:$0xff] %v656
          %689 = vst [vmem:[%s221 + $0xe8] sm:$0xff] %v657
          %690 = vst [vmem:[%s221 + $0xf0] sm:$0xff] %v658
          %691 = vst [vmem:[%s221 + $0xf8] sm:$0xff] %v659
        $region44: #{tpu_custom_call.1} parent=27 // pred_fallthru
          _
        %s692 = sand.u32 %s110, 1
        %s693 = scalar_lea.sflag [#allocation7], %s692
        %s694 = sand.u32 %s110, 1
        %s695 = smul.addr %s694, 256
        %s696 = scalar_lea.vmem [#allocation10], %s695
        // Predicated region
        $region45: #{tpu_custom_call.1} parent=27 // pred_check
          %p697 = pneg %p120
        $region46: #{tpu_custom_call.1} parent=27 // pred_check_branch
          %699 = sbr.rel (%p697) target = $region48
        $region47: #{tpu_custom_call.1} parent=27 // pred_region
          %s700 = smul.u32 32, %s39
          %702 = vsyncadd %s693, 0
          %s703 = smul.addr %s700, 8
          %s704 = scalar_lea.hbm %s4, %s703
          %s705 = sshll.u32 %s696, 4
          %s706 = int_to_ptr.vmem [resolvable:$true] %s705
          %s707 = sshll.u32 %s704, 4
          %s708 = int_to_ptr.hbm [resolvable:$true] %s707
          %713 = dma.vmem_to_hbm [thread:$0]  %s706, 4096, %s708, %s693, 128, 128, 8
        $region48: #{tpu_custom_call.1} parent=27 // pred_fallthru
          _
      $region28: #{tpu_custom_call.1} parent=5 // pred_fallthru
        _
      %p714 = scmp.le.s32.totalorder 2, %s30
      // Predicated region
      $region49: #{tpu_custom_call.1} parent=5 // pred_check
        %p715 = pneg %p714
      $region50: #{tpu_custom_call.1} parent=5 // pred_check_branch
        %717 = sbr.rel (%p715) target = $region52
      $region51: #{tpu_custom_call.1} parent=5 // pred_region
        %s718 = ssub.s32 %s30, 2
        // Predicated region
        $region53: #{tpu_custom_call.1} parent=51 // pred_check
          %p719 = pneg %p126
        $region54: #{tpu_custom_call.1} parent=51 // pred_check_branch
          %721 = sbr.rel (%p719) target = $region56
        $region55: #{tpu_custom_call.1} parent=51 // pred_region
          %s722 = sand.u32 %s111, 1
          %s723 = scalar_lea.sflag [#allocation7], %s722
          %s724 = sand.u32 %s111, 1
          %s725 = smul.addr %s724, 256
          %s726 = scalar_lea.vmem [#allocation10], %s725
          %728 = dma.done %s723, 4096
        $region56: #{tpu_custom_call.1} parent=51 // pred_fallthru
          _
      $region52: #{tpu_custom_call.1} parent=5 // pred_fallthru
        _
    $region6: #{tpu_custom_call.1} parent=1 // loop_footer
      %s34 = sadd.s32 1, %s30
    $region7: #{tpu_custom_call.1} parent=1 // loop_footer_branch
      %29 = sbr.rel target = $region3
    $region8: #{tpu_custom_call.1} parent=1 // loop_exit
      _
    %729 = vsyncpa [#allocation6], 1
    %s730 = scalar_lea.sflag [#allocation6], 1
    %731 = vsyncpa %s730, 1
    %732 = vsyncpa [#allocation9], 1
    %733 = vsyncpa [#allocation7], 1
    %s734 = scalar_lea.sflag [#allocation7], 1
    %735 = vsyncpa %s734, 1

</llo_original>
